<compile_context>
chip_gen: v7x
topology: tpu7x:2x2x1
jax: 0.10.0
libtpu: 0.0.40
codegen_flags: <defaults>
</compile_context>

<pallas_src>
import math
import functools

import jax
import jax.numpy as jnp
from jax import lax
from jax.experimental import pallas as pl
from jax.experimental.pallas import tpu as pltpu


_NEG_BIG = -1e30  # stand-in for -inf that is safe in max / exp arithmetic


def _pick_tile(n, candidates=(512, 256, 128)):
    """Largest nice sequence tile that divides n (v7x-safe sizes); else full."""
    for t in candidates:
        if n % t == 0:
            return t
    return n


# ---------------------------------------------------------------------------
# Pass 1: per-(b,h) key-side statistics with online (flash-style) rescaling
# ---------------------------------------------------------------------------
def _kv_stats_kernel(proj_ref, k_ref, v_ref, ctx_ref, ksum_ref,
                     m_run, s_acc, c_acc, vsum_acc,
                     *, m_real, n_total, eps, ratio, half_norm_sq, needs_mask):
    j = pl.program_id(1)

    @pl.when(j == 0)
    def _():
        m_run[...] = jnp.full_like(m_run, _NEG_BIG)
        s_acc[...] = jnp.zeros_like(s_acc)
        c_acc[...] = jnp.zeros_like(c_acc)
        vsum_acc[...] = jnp.zeros_like(vsum_acc)

    k = k_ref[0]                       # (TK, d)  native dtype
    v = v_ref[0]                       # (TK, d)  native dtype
    proj = proj_ref[...]               # (d, m)   pre-scaled by data_normalizer

    # MXU matmul in native dtype, fp32 accumulation.
    k_dash = jnp.dot(k, proj, preferred_element_type=jnp.float32)   # (TK, m)

    k32 = k.astype(jnp.float32)
    k_diag = jnp.sum(k32 * k32, axis=-1, keepdims=True) * half_norm_sq  # (TK,1)

    if needs_mask:
        col = lax.broadcasted_iota(jnp.int32, k_dash.shape, 1)
        k_dash = jnp.where(col < m_real, k_dash, _NEG_BIG)

    # Online global max over the whole (n, m) slice (matches is_query=False).
    tile_max = jnp.max(k_dash, axis=(0, 1), keepdims=True)          # (1,1)
    m_prev = m_run[...]
    m_new = jnp.maximum(m_prev, tile_max)                            # (1,1)
    alpha = jnp.exp(m_prev - m_new)                                  # (1,1)

    k_exp = jnp.exp(k_dash - k_diag - m_new)        # (TK, m) f32; padded cols -> 0

    s_acc[...] = alpha * s_acc[...] + jnp.sum(k_exp, axis=0, keepdims=True)

    # context contribution: contract the sequence axis directly (no transpose).
    c_contrib = lax.dot_general(
        k_exp.astype(k_ref.dtype), v,
        dimension_numbers=(((0,), (0,)), ((), ())),
        preferred_element_type=jnp.float32)                          # (m, d)
    c_acc[...] = alpha * c_acc[...] + c_contrib

    vsum_acc[...] = vsum_acc[...] + jnp.sum(v.astype(jnp.float32),
                                            axis=0, keepdims=True)   # (1, d)
    m_run[...] = m_new

    @pl.when(j == pl.num_programs(1) - 1)
    def _():
        # fold the separated +eps term and the m^-0.5 ratio back in:
        #   k_cumsum = ratio * (sum exp) + ratio*eps*n
        #   context  = ratio * (exp^T v) + ratio*eps*sum_n v
        ksum_ref[0] = (ratio * s_acc[...]
                       + jnp.float32(ratio * eps * n_total)).astype(ksum_ref.dtype)
        ctx_ref[0] = (ratio * c_acc[...]
                      + (ratio * eps) * vsum_acc[...]).astype(ctx_ref.dtype)


# ---------------------------------------------------------------------------
# Pass 2: per-(b,h, q-tile) query features + normalized output
# ---------------------------------------------------------------------------
def _q_out_kernel(proj_ref, q_ref, ctx_ref, ksum_ref, o_ref,
                  *, m_real, eps, ratio, half_norm_sq, needs_mask):
    q = q_ref[0]                       # (TQ, d) native dtype
    proj = proj_ref[...]               # (d, m)

    q_dash = jnp.dot(q, proj, preferred_element_type=jnp.float32)   # (TQ, m)
    q32 = q.astype(jnp.float32)
    q_diag = jnp.sum(q32 * q32, axis=-1, keepdims=True) * half_norm_sq

    if needs_mask:
        col = lax.broadcasted_iota(jnp.int32, q_dash.shape, 1)
        q_dash = jnp.where(col < m_real, q_dash, _NEG_BIG)

    q_max = jnp.max(q_dash, axis=-1, keepdims=True)                 # per-row max
    q_prime = ratio * (jnp.exp(q_dash - q_diag - q_max) + eps)      # (TQ, m) f32
    if needs_mask:
        q_prime = jnp.where(col < m_real, q_prime, 0.0)

    ksum = ksum_ref[0]                                              # (1, m) f32
    denom = jnp.sum(q_prime * ksum, axis=-1, keepdims=True)         # (TQ, 1)
    d_inv = pl.reciprocal(denom, approx=True)                       # EUP slot

    ctx = ctx_ref[0].astype(q_ref.dtype)                            # (m, d)
    out = jnp.dot(q_prime.astype(q_ref.dtype), ctx,
                  preferred_element_type=jnp.float32) * d_inv       # (TQ, d)
    o_ref[0] = out.astype(o_ref.dtype)


# ---------------------------------------------------------------------------
# Wrapper: Performer FastAttention forward (softmax kernel, non-causal)
# ---------------------------------------------------------------------------
def fast_attention_pallas(q, k, v, projection_matrix, eps=1e-4):
    b, h, n, d = q.shape
    bh = b * h
    m_real = projection_matrix.shape[0]
    m = ((m_real + 127) // 128) * 128          # lane-align feature dim
    needs_mask = (m != m_real)

    data_normalizer = float(d) ** (-0.25)
    ratio = float(m_real) ** (-0.5)
    half_norm_sq = 0.5 * data_normalizer ** 2

    # Pre-scale + pre-transpose the projection on the host (once per call).
    proj_dm = (projection_matrix.astype(jnp.float32) * data_normalizer).T  # (d, m0)
    if needs_mask:
        proj_dm = jnp.pad(proj_dm, ((0, 0), (0, m - m_real)))
    proj_dm = proj_dm.astype(q.dtype)                                      # (d, m)

    q_f = q.reshape(bh, n, d)
    k_f = k.reshape(bh, n, d)
    v_f = v.reshape(bh, n, d)

    tk = _pick_tile(n)
    tq = _pick_tile(n)
    nk = n // tk
    nq = n // tq
    itm = jnp.dtype(q.dtype).itemsize

    # ----------------------------- pass 1 ---------------------------------
    kv_kernel = functools.partial(
        _kv_stats_kernel, m_real=m_real, n_total=n, eps=float(eps),
        ratio=ratio, half_norm_sq=half_norm_sq, needs_mask=needs_mask)

    vmem1 = (2 * (d * m + 2 * tk * d) * itm      # double-buffered inputs
             + 2 * (m * d + m) * 4               # double-buffered f32 outputs
             + (m * d + m + d + 8) * 4           # scratch accumulators
             + 3 * tk * m * 4)                   # in-kernel temporaries
    vmem1 = int(min(max(2 * vmem1, 16 * 1024 * 1024), 64 * 1024 * 1024))

    cost1 = pl.CostEstimate(
        flops=int(4 * bh * n * d * m),
        transcendentals=int(bh * n * m),
        bytes_accessed=int((2 * bh * n * d + d * m) * itm + bh * (m * d + m) * 4))

    ctx_all, ksum_all = pl.pallas_call(
        kv_kernel,
        out_shape=(jax.ShapeDtypeStruct((bh, m, d), jnp.float32),
                   jax.ShapeDtypeStruct((bh, 1, m), jnp.float32)),
        grid=(bh, nk),
        in_specs=[
            pl.BlockSpec((d, m), lambda i, j: (0, 0)),          # projection
            pl.BlockSpec((1, tk, d), lambda i, j: (i, j, 0)),   # k tile
            pl.BlockSpec((1, tk, d), lambda i, j: (i, j, 0)),   # v tile
        ],
        out_specs=(
            pl.BlockSpec((1, m, d), lambda i, j: (i, 0, 0)),    # context
            pl.BlockSpec((1, 1, m), lambda i, j: (i, 0, 0)),    # k_cumsum
        ),
        scratch_shapes=[
            pltpu.VMEM((1, 1), jnp.float32),    # running key max
            pltpu.VMEM((1, m), jnp.float32),    # sum exp
            pltpu.VMEM((m, d), jnp.float32),    # exp^T v
            pltpu.VMEM((1, d), jnp.float32),    # sum v (eps term)
        ],
        compiler_params=pltpu.CompilerParams(
            dimension_semantics=("parallel", "arbitrary"),
            vmem_limit_bytes=vmem1),
        cost_estimate=cost1,
    )(proj_dm, k_f, v_f)

    # ----------------------------- pass 2 ---------------------------------
    q_kernel = functools.partial(
        _q_out_kernel, m_real=m_real, eps=float(eps),
        ratio=ratio, half_norm_sq=half_norm_sq, needs_mask=needs_mask)

    vmem2 = (2 * (d * m * itm + tq * d * itm + m * d * 4 + m * 4)  # inputs (dbl buf)
             + 2 * tq * d * itm                                    # output (dbl buf)
             + 3 * tq * m * 4)                                     # temporaries
    vmem2 = int(min(max(2 * vmem2, 16 * 1024 * 1024), 64 * 1024 * 1024))

    cost2 = pl.CostEstimate(
        flops=int(4 * bh * n * d * m),
        transcendentals=int(bh * n * m),
        bytes_accessed=int((2 * bh * n * d + d * m) * itm + bh * (m * d + m) * 4))

    out = pl.pallas_call(
        q_kernel,
        out_shape=jax.ShapeDtypeStruct((bh, n, d), q.dtype),
        grid=(bh, nq),
        in_specs=[
            pl.BlockSpec((d, m), lambda i, j: (0, 0)),          # projection
            pl.BlockSpec((1, tq, d), lambda i, j: (i, j, 0)),   # q tile
            pl.BlockSpec((1, m, d), lambda i, j: (i, 0, 0)),    # context
            pl.BlockSpec((1, 1, m), lambda i, j: (i, 0, 0)),    # k_cumsum
        ],
        out_specs=pl.BlockSpec((1, tq, d), lambda i, j: (i, j, 0)),
        compiler_params=pltpu.CompilerParams(
            dimension_semantics=("parallel", "parallel"),
            vmem_limit_bytes=vmem2),
        cost_estimate=cost2,
    )(proj_dm, q_f, ctx_all, ksum_all)

    return out.reshape(b, h, n, d)


# ---------------------------------------------------------------------------
# Parameter setup glue (plain JAX): gaussian orthogonal random matrix
# ---------------------------------------------------------------------------
def orthogonal_matrix_chunk(cols, key):
    block = jax.random.normal(key, (cols, cols), dtype=jnp.float32)
    qm, _ = jnp.linalg.qr(block)
    return qm.T


def gaussian_orthogonal_random_matrix(nb_rows, nb_columns, key, scaling=0):
    nb_full_blocks = nb_rows // nb_columns
    keys = jax.random.split(key, nb_full_blocks + 2)
    blocks = []
    for i in range(nb_full_blocks):
        blocks.append(orthogonal_matrix_chunk(nb_columns, keys[i]))
    remaining = nb_rows - nb_full_blocks * nb_columns
    if remaining > 0:
        qm = orthogonal_matrix_chunk(nb_columns, keys[nb_full_blocks])
        blocks.append(qm[:remaining])
    final_matrix = jnp.concatenate(blocks, axis=0)
    if scaling == 0:
        multiplier = jnp.linalg.norm(
            jax.random.normal(keys[-1], (nb_rows, nb_columns), dtype=jnp.float32),
            axis=1)
    elif scaling == 1:
        multiplier = math.sqrt(float(nb_columns)) * jnp.ones((nb_rows,), jnp.float32)
    else:
        raise ValueError(f"Invalid scaling {scaling}")
    return multiplier[:, None] * final_matrix


class FastAttentionJAX:
    """Mirror of performer FastAttention (softmax-kernel, non-causal path)."""

    def __init__(self, dim_heads, nb_features=None, ortho_scaling=0, key=None):
        self.dim_heads = dim_heads
        self.nb_features = (nb_features if nb_features is not None
                            else int(dim_heads * math.log(dim_heads)))
        self.ortho_scaling = ortho_scaling
        self._key = key if key is not None else jax.random.PRNGKey(0)
        self.projection_matrix = gaussian_orthogonal_random_matrix(
            self.nb_features, dim_heads, self._key, scaling=ortho_scaling)

    def redraw_projection_matrix(self):
        self._key, sub = jax.random.split(self._key)
        self.projection_matrix = gaussian_orthogonal_random_matrix(
            self.nb_features, self.dim_heads, sub, scaling=self.ortho_scaling)

    def __call__(self, q, k, v):
        return fast_attention_pallas(q, k, v, self.projection_matrix)


class ProjectionUpdaterJAX:
    """JAX analogue of ProjectionUpdater: wraps an instance + redraw counter."""

    def __init__(self, instance, feature_redraw_interval):
        self.instance = instance
        self.feature_redraw_interval = feature_redraw_interval
        self.calls_since_last_redraw = 0
        self.training = True

    def fix_projections_(self):
        self.feature_redraw_interval = None

    def redraw_projections(self):
        if not self.training:
            return
        if (self.feature_redraw_interval is not None
                and self.calls_since_last_redraw >= self.feature_redraw_interval):
            self.instance.redraw_projection_matrix()
            self.calls_since_last_redraw = 0
            return
        self.calls_since_last_redraw += 1

    def forward(self, x):
        # TODO(synk): PyTorch ProjectionUpdater.forward raises NotImplemented;
        # the meaningful compute lives in the wrapped FastAttention (Pallas).
        raise NotImplementedError


# ---------------------------------------------------------------------------
# Pure-JAX reference (mirrors performer softmax_kernel + linear_attention)
# ---------------------------------------------------------------------------
def _reference_fast_attention(q, k, v, projection_matrix, eps=1e-4):
    d = q.shape[-1]
    data_normalizer = float(d) ** (-0.25)
    ratio = float(projection_matrix.shape[0]) ** (-0.5)

    def feat(data, is_query):
        data_dash = jnp.einsum('...id,jd->...ij', data_normalizer * data,
                               projection_matrix)
        diag = jnp.sum(data ** 2, axis=-1, keepdims=True) * 0.5 * data_normalizer ** 2
        if is_query:
            stab = jnp.max(data_dash, axis=-1, keepdims=True)
        else:
            stab = jnp.max(data_dash, axis=(-1, -2), keepdims=True)
        return ratio * (jnp.exp(data_dash - diag - stab) + eps)

    qp = feat(q, True)
    kp = feat(k, False)
    k_cumsum = kp.sum(axis=-2)
    d_inv = 1.0 / jnp.einsum('...nd,...d->...n', qp, k_cumsum)
    context = jnp.einsum('...nd,...ne->...de', kp, v)
    return jnp.einsum('...de,...nd,...n->...ne', context, qp, d_inv)


if __name__ == "__main__":
    # Small deterministic example consistent with FastAttention:
    # q, k, v : (batch=2, heads=2, seq=8, dim_head=32); nb_features = 110 -> 128 padded.
    key = jax.random.PRNGKey(0)
    kq, kk, kv, kp = jax.random.split(key, 4)
    b, h, n, d = 2, 2, 8, 32

    q = jax.random.normal(kq, (b, h, n, d), dtype=jnp.float32)
    k = jax.random.normal(kk, (b, h, n, d), dtype=jnp.float32)
    v = jax.random.normal(kv, (b, h, n, d), dtype=jnp.float32)

    fast_attn = FastAttentionJAX(dim_heads=d, key=kp)
    updater = ProjectionUpdaterJAX(fast_attn, feature_redraw_interval=4)
    updater.redraw_projections()  # counter bookkeeping (host glue)

    out = updater.instance(q, k, v)
    out = jax.block_until_ready(out)

    assert out.shape == (b, h, n, d)
    assert bool(jnp.all(jnp.isfinite(out)))

    ref = _reference_fast_attention(q, k, v, fast_attn.projection_matrix)
    ref = jax.block_until_ready(ref)
    ok = bool(jnp.all(jnp.abs(out - ref) <= 2e-2 + 2e-2 * jnp.abs(ref)))
    assert ok, "Pallas output diverges from performer reference"

    print("KERNEL_OK")
</pallas_src>

<mosaic_0001>
module attributes {stable_mosaic.version = 11 : i64} {
  func.func @_kv_stats_kernel(%arg0: i32, %arg1: i32, %arg2: memref<32x128xf32, #tpu.memory_space<vmem>>, %arg3: memref<1x8x32xf32, #tpu.memory_space<vmem>>, %arg4: memref<1x8x32xf32, #tpu.memory_space<vmem>>, %arg5: memref<1x128x32xf32, #tpu.memory_space<vmem>>, %arg6: memref<1x1x128xf32, #tpu.memory_space<vmem>>, %arg7: memref<1x1xf32, #tpu.memory_space<vmem>>, %arg8: memref<1x128xf32, #tpu.memory_space<vmem>>, %arg9: memref<128x32xf32, #tpu.memory_space<vmem>>, %arg10: memref<1x32xf32, #tpu.memory_space<vmem>>) attributes {dimension_semantics = [#tpu.dimension_semantics<parallel>, #tpu.dimension_semantics<arbitrary>], iteration_bounds = array<i64: 4, 1>, scalar_prefetch = 0 : i64, scratch_operands = 4 : i64, tpu.core_type = #tpu.core_type<tc>, window_params = [{pipeline_mode = #tpu.pipeline_mode<synchronous>, transform_indices = @transform_0, window_bounds = array<i64: 32, 128>}, {transform_indices = @transform_1, window_bounds = array<i64: 1, 8, 32>}, {transform_indices = @transform_2, window_bounds = array<i64: 1, 8, 32>}, {transform_indices = @transform_3, window_bounds = array<i64: 1, 128, 32>}, {transform_indices = @transform_4, window_bounds = array<i64: 1, 1, 128>}]} {
    %c0_i32 = arith.constant 0 : i32
    %0 = arith.cmpi eq, %arg1, %c0_i32 : i32
    %1 = arith.extui %0 : i1 to i32
    %c0_i32_0 = arith.constant 0 : i32
    %2 = arith.cmpi ne, %1, %c0_i32_0 : i32
    scf.if %2 {
      %cst_33 = arith.constant -1.000000e+30 : f32
      %55 = vector.broadcast %cst_33 : f32 to vector<1x1xf32>
      %c0_34 = arith.constant 0 : index
      %c0_35 = arith.constant 0 : index
      %56 = vector.load %arg7[%c0_34, %c0_35] : memref<1x1xf32, #tpu.memory_space<vmem>>, vector<1x1xf32>
      tpu.vector_store %arg7[%c0_34, %c0_35], %55 {strides = array<i32>} : memref<1x1xf32, #tpu.memory_space<vmem>>, vector<1x1xf32>,
      %cst_36 = arith.constant 0.000000e+00 : f32
      %57 = vector.broadcast %cst_36 : f32 to vector<1x128xf32>
      %c0_37 = arith.constant 0 : index
      %c0_38 = arith.constant 0 : index
      %58 = vector.load %arg8[%c0_37, %c0_38] : memref<1x128xf32, #tpu.memory_space<vmem>>, vector<1x128xf32>
      tpu.vector_store %arg8[%c0_37, %c0_38], %57 {strides = array<i32>} : memref<1x128xf32, #tpu.memory_space<vmem>>, vector<1x128xf32>,
      %cst_39 = arith.constant 0.000000e+00 : f32
      %59 = vector.broadcast %cst_39 : f32 to vector<128x32xf32>
      %c0_40 = arith.constant 0 : index
      %c0_41 = arith.constant 0 : index
      %60 = vector.load %arg9[%c0_40, %c0_41] : memref<128x32xf32, #tpu.memory_space<vmem>>, vector<128x32xf32>
      tpu.vector_store %arg9[%c0_40, %c0_41], %59 {strides = array<i32>} : memref<128x32xf32, #tpu.memory_space<vmem>>, vector<128x32xf32>,
      %cst_42 = arith.constant 0.000000e+00 : f32
      %61 = vector.broadcast %cst_42 : f32 to vector<1x32xf32>
      %c0_43 = arith.constant 0 : index
      %c0_44 = arith.constant 0 : index
      %62 = vector.load %arg10[%c0_43, %c0_44] : memref<1x32xf32, #tpu.memory_space<vmem>>, vector<1x32xf32>
      tpu.vector_store %arg10[%c0_43, %c0_44], %61 {strides = array<i32>} : memref<1x32xf32, #tpu.memory_space<vmem>>, vector<1x32xf32>,
    } else {
    }
    %c0 = arith.constant 0 : index
    %c0_1 = arith.constant 0 : index
    %c0_2 = arith.constant 0 : index
    %3 = vector.load %arg3[%c0, %c0_1, %c0_2] : memref<1x8x32xf32, #tpu.memory_space<vmem>>, vector<1x8x32xf32>
    %4 = vector.shape_cast %3 : vector<1x8x32xf32> to vector<8x32xf32>
    %c0_3 = arith.constant 0 : index
    %c0_4 = arith.constant 0 : index
    %c0_5 = arith.constant 0 : index
    %5 = vector.load %arg4[%c0_3, %c0_4, %c0_5] : memref<1x8x32xf32, #tpu.memory_space<vmem>>, vector<1x8x32xf32>
    %6 = vector.shape_cast %5 : vector<1x8x32xf32> to vector<8x32xf32>
    %c0_6 = arith.constant 0 : index
    %c0_7 = arith.constant 0 : index
    %7 = vector.load %arg2[%c0_6, %c0_7] : memref<32x128xf32, #tpu.memory_space<vmem>>, vector<32x128xf32>
    %cst = arith.constant dense<0.000000e+00> : vector<8x128xf32>
    %8 = tpu.matmul %4, %7, %cst {dimension_numbers = #tpu.dot_dimension_numbers<[1], [0], [0], [1], [0, 0, 1, 1], [], []>} : vector<8x32xf32>, vector<32x128xf32>, vector<8x128xf32> -> vector<8x128xf32>
    %9 = arith.mulf %4, %4 : vector<8x32xf32>
    %cst_8 = arith.constant dense<0.000000e+00> : vector<8xf32>
    %10 = vector.multi_reduction <add>, %9, %cst_8 [1] : vector<8x32xf32> to vector<8xf32>
    %11 = vector.shape_cast %10 : vector<8xf32> to vector<8x1xf32>
    %cst_9 = arith.constant 0.0883883461 : f32
    %12 = vector.broadcast %cst_9 : f32 to vector<8x1xf32>
    %13 = arith.mulf %11, %12 : vector<8x1xf32>
    %14 = tpu.iota {dimensions = array<i32: 1>} : vector<8x128xi32>
    %c110_i32 = arith.constant 110 : i32
    %15 = vector.broadcast %c110_i32 : i32 to vector<8x128xi32>
    %16 = arith.cmpi slt, %14, %15 : vector<8x128xi32>
    %cst_10 = arith.constant -1.000000e+30 : f32
    %17 = vector.broadcast %cst_10 : f32 to vector<8x128xf32>
    %18 = arith.select %16, %8, %17 : vector<8x128xi1>, vector<8x128xf32>
    %19 = vector.shape_cast %18 : vector<8x128xf32> to vector<1x8x128xf32>
    %cst_11 = arith.constant dense<0xFF800000> : vector<1xf32>
    %20 = vector.multi_reduction <maximumf>, %19, %cst_11 [1, 2] : vector<1x8x128xf32> to vector<1xf32>
    %21 = vector.shape_cast %20 : vector<1xf32> to vector<1x1x1xf32>
    %22 = vector.extract %21[0, 0, 0] : f32 from vector<1x1x1xf32>
    %23 = vector.broadcast %22 : f32 to vector<1x1xf32>
    %c0_12 = arith.constant 0 : index
    %c0_13 = arith.constant 0 : index
    %24 = vector.load %arg7[%c0_12, %c0_13] : memref<1x1xf32, #tpu.memory_space<vmem>>, vector<1x1xf32>
    %25 = arith.maximumf %24, %23 : vector<1x1xf32>
    %26 = arith.subf %24, %25 : vector<1x1xf32>
    %27 = math.exp %26 : vector<1x1xf32>
    %28 = vector.broadcast %13 : vector<8x1xf32> to vector<8x128xf32>
    %29 = arith.subf %18, %28 : vector<8x128xf32>
    %30 = vector.broadcast %25 : vector<1x1xf32> to vector<8x128xf32>
    %31 = arith.subf %29, %30 : vector<8x128xf32>
    %32 = math.exp %31 : vector<8x128xf32>
    %c0_14 = arith.constant 0 : index
    %c0_15 = arith.constant 0 : index
    %33 = vector.load %arg8[%c0_14, %c0_15] : memref<1x128xf32, #tpu.memory_space<vmem>>, vector<1x128xf32>
    %34 = vector.broadcast %27 : vector<1x1xf32> to vector<1x128xf32>
    %35 = arith.mulf %34, %33 : vector<1x128xf32>
    %cst_16 = arith.constant dense<0.000000e+00> : vector<128xf32>
    %36 = vector.multi_reduction <add>, %32, %cst_16 [0] : vector<8x128xf32> to vector<128xf32>
    %37 = vector.shape_cast %36 : vector<128xf32> to vector<1x128xf32>
    %38 = arith.addf %35, %37 : vector<1x128xf32>
    %c0_17 = arith.constant 0 : index
    %c0_18 = arith.constant 0 : index
    %39 = vector.load %arg8[%c0_17, %c0_18] : memref<1x128xf32, #tpu.memory_space<vmem>>, vector<1x128xf32>
    tpu.vector_store %arg8[%c0_17, %c0_18], %38 {strides = array<i32>} : memref<1x128xf32, #tpu.memory_space<vmem>>, vector<1x128xf32>,
    %cst_19 = arith.constant dense<0.000000e+00> : vector<128x32xf32>
    %40 = tpu.matmul %32, %6, %cst_19 {dimension_numbers = #tpu.dot_dimension_numbers<[0], [0], [1], [1], [0, 1, 1, 1], [], []>} : vector<8x128xf32>, vector<8x32xf32>, vector<128x32xf32> -> vector<128x32xf32>
    %c0_20 = arith.constant 0 : index
    %c0_21 = arith.constant 0 : index
    %41 = vector.load %arg9[%c0_20, %c0_21] : memref<128x32xf32, #tpu.memory_space<vmem>>, vector<128x32xf32>
    %42 = vector.broadcast %27 : vector<1x1xf32> to vector<128x32xf32>
    %43 = arith.mulf %42, %41 : vector<128x32xf32>
    %44 = arith.addf %43, %40 : vector<128x32xf32>
    %c0_22 = arith.constant 0 : index
    %c0_23 = arith.constant 0 : index
    %45 = vector.load %arg9[%c0_22, %c0_23] : memref<128x32xf32, #tpu.memory_space<vmem>>, vector<128x32xf32>
    tpu.vector_store %arg9[%c0_22, %c0_23], %44 {strides = array<i32>} : memref<128x32xf32, #tpu.memory_space<vmem>>, vector<128x32xf32>,
    %c0_24 = arith.constant 0 : index
    %c0_25 = arith.constant 0 : index
    %46 = vector.load %arg10[%c0_24, %c0_25] : memref<1x32xf32, #tpu.memory_space<vmem>>, vector<1x32xf32>
    %cst_26 = arith.constant dense<0.000000e+00> : vector<32xf32>
    %47 = vector.multi_reduction <add>, %6, %cst_26 [0] : vector<8x32xf32> to vector<32xf32>
    %48 = vector.shape_cast %47 : vector<32xf32> to vector<1x32xf32>
    %49 = arith.addf %46, %48 : vector<1x32xf32>
    %c0_27 = arith.constant 0 : index
    %c0_28 = arith.constant 0 : index
    %50 = vector.load %arg10[%c0_27, %c0_28] : memref<1x32xf32, #tpu.memory_space<vmem>>, vector<1x32xf32>
    tpu.vector_store %arg10[%c0_27, %c0_28], %49 {strides = array<i32>} : memref<1x32xf32, #tpu.memory_space<vmem>>, vector<1x32xf32>,
    %c0_29 = arith.constant 0 : index
    %c0_30 = arith.constant 0 : index
    %51 = vector.load %arg7[%c0_29, %c0_30] : memref<1x1xf32, #tpu.memory_space<vmem>>, vector<1x1xf32>
    tpu.vector_store %arg7[%c0_29, %c0_30], %25 {strides = array<i32>} : memref<1x1xf32, #tpu.memory_space<vmem>>, vector<1x1xf32>,
    %c0_i32_31 = arith.constant 0 : i32
    %52 = arith.cmpi eq, %arg1, %c0_i32_31 : i32
    %53 = arith.extui %52 : i1 to i32
    %c0_i32_32 = arith.constant 0 : i32
    %54 = arith.cmpi ne, %53, %c0_i32_32 : i32
    scf.if %54 {
      %c0_33 = arith.constant 0 : index
      %c0_34 = arith.constant 0 : index
      %55 = vector.load %arg8[%c0_33, %c0_34] : memref<1x128xf32, #tpu.memory_space<vmem>>, vector<1x128xf32>
      %cst_35 = arith.constant 0.0953462571 : f32
      %56 = vector.broadcast %cst_35 : f32 to vector<1x128xf32>
      %57 = arith.mulf %56, %55 : vector<1x128xf32>
      %cst_36 = arith.constant 7.62770068E-5 : f32
      %58 = vector.broadcast %cst_36 : f32 to vector<1x128xf32>
      %59 = arith.addf %57, %58 : vector<1x128xf32>
      %c0_37 = arith.constant 0 : index
      %c0_38 = arith.constant 0 : index
      %c0_39 = arith.constant 0 : index
      %60 = vector.load %arg6[%c0_37, %c0_38, %c0_39] : memref<1x1x128xf32, #tpu.memory_space<vmem>>, vector<1x1x128xf32>
      %61 = vector.shape_cast %60 : vector<1x1x128xf32> to vector<1x128xf32>
      %62 = vector.shape_cast %59 : vector<1x128xf32> to vector<1x1x128xf32>
      tpu.vector_store %arg6[%c0_37, %c0_38, %c0_39], %62 {strides = array<i32>} : memref<1x1x128xf32, #tpu.memory_space<vmem>>, vector<1x1x128xf32>,
      %c0_40 = arith.constant 0 : index
      %c0_41 = arith.constant 0 : index
      %63 = vector.load %arg9[%c0_40, %c0_41] : memref<128x32xf32, #tpu.memory_space<vmem>>, vector<128x32xf32>
      %cst_42 = arith.constant 0.0953462571 : f32
      %64 = vector.broadcast %cst_42 : f32 to vector<128x32xf32>
      %65 = arith.mulf %64, %63 : vector<128x32xf32>
      %c0_43 = arith.constant 0 : index
      %c0_44 = arith.constant 0 : index
      %66 = vector.load %arg10[%c0_43, %c0_44] : memref<1x32xf32, #tpu.memory_space<vmem>>, vector<1x32xf32>
      %cst_45 = arith.constant 9.53462586E-6 : f32
      %67 = vector.broadcast %cst_45 : f32 to vector<1x32xf32>
      %68 = arith.mulf %67, %66 : vector<1x32xf32>
      %69 = vector.broadcast %68 : vector<1x32xf32> to vector<128x32xf32>
      %70 = arith.addf %65, %69 : vector<128x32xf32>
      %c0_46 = arith.constant 0 : index
      %c0_47 = arith.constant 0 : index
      %c0_48 = arith.constant 0 : index
      %71 = vector.load %arg5[%c0_46, %c0_47, %c0_48] : memref<1x128x32xf32, #tpu.memory_space<vmem>>, vector<1x128x32xf32>
      %72 = vector.shape_cast %71 : vector<1x128x32xf32> to vector<128x32xf32>
      %73 = vector.shape_cast %70 : vector<128x32xf32> to vector<1x128x32xf32>
      tpu.vector_store %arg5[%c0_46, %c0_47, %c0_48], %73 {strides = array<i32>} : memref<1x128x32xf32, #tpu.memory_space<vmem>>, vector<1x128x32xf32>,
    } else {
    }
    return
  }
  func.func @transform_0(%arg0: i32, %arg1: i32) -> (i32, i32) {
    %c0_i32 = arith.constant 0 : i32
    %c0_i32_0 = arith.constant 0 : i32
    %c0_i32_1 = arith.constant 0 : i32
    return %c0_i32, %c0_i32_0 : i32, i32
  }
  func.func @transform_1(%arg0: i32, %arg1: i32) -> (i32, i32, i32) {
    %c0_i32 = arith.constant 0 : i32
    %c0_i32_0 = arith.constant 0 : i32
    return %arg0, %arg1, %c0_i32 : i32, i32, i32
  }
  func.func @transform_2(%arg0: i32, %arg1: i32) -> (i32, i32, i32) {
    %c0_i32 = arith.constant 0 : i32
    %c0_i32_0 = arith.constant 0 : i32
    return %arg0, %arg1, %c0_i32 : i32, i32, i32
  }
  func.func @transform_3(%arg0: i32, %arg1: i32) -> (i32, i32, i32) {
    %c0_i32 = arith.constant 0 : i32
    %c0_i32_0 = arith.constant 0 : i32
    %c0_i32_1 = arith.constant 0 : i32
    return %arg0, %c0_i32, %c0_i32_0 : i32, i32, i32
  }
  func.func @transform_4(%arg0: i32, %arg1: i32) -> (i32, i32, i32) {
    %c0_i32 = arith.constant 0 : i32
    %c0_i32_0 = arith.constant 0 : i32
    %c0_i32_1 = arith.constant 0 : i32
    return %arg0, %c0_i32, %c0_i32_0 : i32, i32, i32
  }
}

</mosaic_0001>

<llo_original>
// kernel: tpu_custom_call.1
$region0: #{tpu_custom_call.1}
  #allocation0 [shape = 'u32[]', space=smem, size = 0x4, offset = 0x4, fixed_abs, tag = 'smem constant byte address 0x4 - core index']
  #allocation1 [shape = 'u32[144,128]{1,0:T(1,128)}', space=vmem, size = 0x12000, scoped, tag = 'internal scratch']
  #allocation2 [shape = 'f32[1,1]{1,0:T(1,128)}', space=vmem, size = 0x200, scoped, tag = 'scratch operand']
  #allocation3 [shape = 'f32[1,128]{1,0:T(1,128)}', space=vmem, size = 0x200, scoped, tag = 'scratch operand']
  #allocation4 [shape = 'f32[128,32]{1,0:T(8,128)}', space=vmem, size = 0x10000, scoped, tag = 'scratch operand']
  #allocation5 [shape = 'f32[1,32]{1,0:T(1,128)}', space=vmem, size = 0x200, scoped, tag = 'scratch operand']
  %s0 = inlined_call_operand.hbm [shape: f32[32,128], index: 0, kind: input, shape index: {}]
  %s1 = inlined_call_operand.hbm [shape: f32[4,8,32], index: 1, kind: input, shape index: {}]
  %s2 = inlined_call_operand.hbm [shape: f32[4,8,32], index: 2, kind: input, shape index: {}]
  %s3 = inlined_call_operand.vmem [shape: f32[4,128,32], index: 3, kind: output, shape index: {0}]
  %s4 = inlined_call_operand.hbm [shape: f32[4,1,128], index: 4, kind: output, shape index: {1}]
  %5 = xla_tuple %s3, %s4
  %s6 = sld [smem:[#allocation0]]
  $region73: #{tpu_custom_call.1} parent=0
    _
  %s8 = ssub.s32 1, %s6
  %s9 = scalar_select 0, %s8, %s6
  $region1: #{tpu_custom_call.1} parent=0
    #allocation6 [shape = 'u8[16384]{0}', space=vmem, size = 0x4000, scoped, tag = 'input window, operand 0, single buffered']
    #allocation7 [shape = 's32[2]{0}', space=sflag, size = 0x8, scoped, tag = 'scoped memory for tpu_custom_call.1']
    #allocation8 [shape = 's32[2]{0}', space=sflag, size = 0x8, scoped, tag = 'scoped memory for tpu_custom_call.1']
    #allocation9 [shape = 'u8[8192]{0}', space=vmem, size = 0x2000, scoped, tag = 'input window, operand 1']
    #allocation10 [shape = 's32[2]{0}', space=sflag, size = 0x8, scoped, tag = 'scoped memory for tpu_custom_call.1']
    #allocation11 [shape = 'u8[8192]{0}', space=vmem, size = 0x2000, scoped, tag = 'input window, operand 2']
    #allocation12 [shape = 'u8[1024]{0}', space=vmem, size = 0x400, scoped, tag = 'output window, operand 1']
    %10 = vsyncpa [#allocation7], 0
    %11 = vsyncpa [#allocation10], 0
    %s12 = scalar_lea.sflag [#allocation10], 1
    %13 = vsyncpa %s12, 0
    %14 = vsyncpa [#allocation8], 0
    %s15 = scalar_lea.sflag [#allocation8], 1
    %16 = vsyncpa %s15, 0
    loop: start=0, step=1, limit=6
    $region2: #{tpu_custom_call.1} parent=1 // loop_pre_header
      _
    $region3: #{tpu_custom_call.1} parent=1 // loop_header
      %s18 = sphi 0, %s22
      %p19 = scmp.ge.s32.totalorder %s18, 6
      %s25 = sphi 0, %s37
      %s26 = sphi 0, %s33
      %s27 = sphi 0, %s25
      %s28 = sphi 0, %s26
      %s29 = sphi 0, %s27
      %s30 = sphi 0, %s28
      %s38 = sphi 0, %s38
      %s40 = sphi 0, %s38
      %s41 = sphi 0, %s40
      %s55 = sphi 0, %s41
      %s63 = sphi 0, %s65
      %s66 = sphi 0, %s63
      %s67 = sphi 0, %s66
      %s83 = sphi 0, %s67
      %s91 = sphi 0, %s93
      %s94 = sphi 0, %s91
      %s95 = sphi 0, %s94
      %s111 = sphi 0, %s95
      %s117 = sphi 0, %s119
      %s120 = sphi 0, %s117
      %s121 = sphi 0, %s120
      %s137 = sphi 0, %s121
      %s143 = sphi 0, %s145
      %s146 = sphi 0, %s143
      %s147 = sphi 0, %s146
      %s163 = sphi 0, %s147
    $region4: #{tpu_custom_call.1} parent=1 // loop_header_branch
      %21 = sbr.rel (%p19) target = $region8
    $region5: #{tpu_custom_call.1} parent=1 // loop_body
      %s23 = ssub.s32 %s18, 1
      %s24 = ssub.s32 %s18, 2
      %s31 = sadd.s32 1, %s26
      %p32 = scmp.ge.s32.totalorder %s31, 1
      %s33 = scalar_select %p32, 0, %s31
      %s34 = sadd.s32 1, %s25
      %s35 = scalar_select %p32, %s34, %s25
      %p36 = scmp.ge.s32.totalorder %s35, 4
      %s37 = scalar_select %p36, 0, %s35
      %s39 = sadd.s32 %s38, 1
      %p42 = scmp.eq.s32.totalorder %s18, 3
      %p43 = scmp.ne.s32.totalorder %s38, %s40
      %p44 = scmp.eq.s32.totalorder %s18, 0
      %p45 = por %p43, %p44
      %p46 = scmp.ne.s32.totalorder %s38, %s40
      %p47 = scmp.eq.s32.totalorder %s23, 3
      %p48 = por %p46, %p47
      %p49 = scmp.ne.s32.totalorder %s40, %s41
      %p50 = scmp.eq.s32.totalorder %s23, 0
      %p51 = por %p49, %p50
      %p52 = scmp.ne.s32.totalorder %s40, %s41
      %p53 = scmp.eq.s32.totalorder %s24, 3
      %p54 = por %p52, %p53
      %p56 = scmp.ne.s32.totalorder %s41, %s55
      %p57 = scmp.eq.s32.totalorder %s24, 0
      %p58 = por %p56, %p57
      %s59 = ssub.s32 %s25, %s37
      %s60 = ssub.s32 %s26, %s33
      %s61 = sor.u32 %s59, %s60
      %p62 = scmp.eq.s32.totalorder %s61, 0
      %s64 = sadd.s32 %s63, 1
      %s65 = scalar_select %p62, %s63, %s64
      %p68 = pneg %p62
      %p69 = scmp.eq.s32.totalorder %s18, 3
      %p70 = por %p68, %p69
      %p71 = scmp.ne.s32.totalorder %s63, %s66
      %p72 = scmp.eq.s32.totalorder %s18, 0
      %p73 = por %p71, %p72
      %p74 = scmp.ne.s32.totalorder %s63, %s66
      %p75 = scmp.eq.s32.totalorder %s23, 3
      %p76 = por %p74, %p75
      %p77 = scmp.ne.s32.totalorder %s66, %s67
      %p78 = scmp.eq.s32.totalorder %s23, 0
      %p79 = por %p77, %p78
      %p80 = scmp.ne.s32.totalorder %s66, %s67
      %p81 = scmp.eq.s32.totalorder %s24, 3
      %p82 = por %p80, %p81
      %p84 = scmp.ne.s32.totalorder %s67, %s83
      %p85 = scmp.eq.s32.totalorder %s24, 0
      %p86 = por %p84, %p85
      %s87 = ssub.s32 %s25, %s37
      %s88 = ssub.s32 %s26, %s33
      %s89 = sor.u32 %s87, %s88
      %p90 = scmp.eq.s32.totalorder %s89, 0
      %s92 = sadd.s32 %s91, 1
      %s93 = scalar_select %p90, %s91, %s92
      %p96 = pneg %p90
      %p97 = scmp.eq.s32.totalorder %s18, 3
      %p98 = por %p96, %p97
      %p99 = scmp.ne.s32.totalorder %s91, %s94
      %p100 = scmp.eq.s32.totalorder %s18, 0
      %p101 = por %p99, %p100
      %p102 = scmp.ne.s32.totalorder %s91, %s94
      %p103 = scmp.eq.s32.totalorder %s23, 3
      %p104 = por %p102, %p103
      %p105 = scmp.ne.s32.totalorder %s94, %s95
      %p106 = scmp.eq.s32.totalorder %s23, 0
      %p107 = por %p105, %p106
      %p108 = scmp.ne.s32.totalorder %s94, %s95
      %p109 = scmp.eq.s32.totalorder %s24, 3
      %p110 = por %p108, %p109
      %p112 = scmp.ne.s32.totalorder %s95, %s111
      %p113 = scmp.eq.s32.totalorder %s24, 0
      %p114 = por %p112, %p113
      %s115 = ssub.s32 %s25, %s37
      %p116 = scmp.eq.s32.totalorder %s115, 0
      %s118 = sadd.s32 %s117, 1
      %s119 = scalar_select %p116, %s117, %s118
      %p122 = pneg %p116
      %p123 = scmp.eq.s32.totalorder %s18, 3
      %p124 = por %p122, %p123
      %p125 = scmp.ne.s32.totalorder %s117, %s120
      %p126 = scmp.eq.s32.totalorder %s18, 0
      %p127 = por %p125, %p126
      %p128 = scmp.ne.s32.totalorder %s117, %s120
      %p129 = scmp.eq.s32.totalorder %s23, 3
      %p130 = por %p128, %p129
      %p131 = scmp.ne.s32.totalorder %s120, %s121
      %p132 = scmp.eq.s32.totalorder %s23, 0
      %p133 = por %p131, %p132
      %p134 = scmp.ne.s32.totalorder %s120, %s121
      %p135 = scmp.eq.s32.totalorder %s24, 3
      %p136 = por %p134, %p135
      %p138 = scmp.ne.s32.totalorder %s121, %s137
      %p139 = scmp.eq.s32.totalorder %s24, 0
      %p140 = por %p138, %p139
      %s141 = ssub.s32 %s25, %s37
      %p142 = scmp.eq.s32.totalorder %s141, 0
      %s144 = sadd.s32 %s143, 1
      %s145 = scalar_select %p142, %s143, %s144
      %p148 = pneg %p142
      %p149 = scmp.eq.s32.totalorder %s18, 3
      %p150 = por %p148, %p149
      %p151 = scmp.ne.s32.totalorder %s143, %s146
      %p152 = scmp.eq.s32.totalorder %s18, 0
      %p153 = por %p151, %p152
      %p154 = scmp.ne.s32.totalorder %s143, %s146
      %p155 = scmp.eq.s32.totalorder %s23, 3
      %p156 = por %p154, %p155
      %p157 = scmp.ne.s32.totalorder %s146, %s147
      %p158 = scmp.eq.s32.totalorder %s23, 0
      %p159 = por %p157, %p158
      %p160 = scmp.ne.s32.totalorder %s146, %s147
      %p161 = scmp.eq.s32.totalorder %s24, 3
      %p162 = por %p160, %p161
      %p164 = scmp.ne.s32.totalorder %s147, %s163
      %p165 = scmp.eq.s32.totalorder %s24, 0
      %p166 = por %p164, %p165
      %p167 = scmp.le.s32.totalorder 1, %s18
      %p168 = scmp.lt.s32.totalorder %s18, 5
      %p169 = pnand %p167, %p168
      %p170 = pneg %p169
      // Predicated region
      $region9: #{tpu_custom_call.1} parent=5 // pred_check
        _
      $region10: #{tpu_custom_call.1} parent=5 // pred_check_branch
        %172 = sbr.rel (%p169) target = $region12
      $region11: #{tpu_custom_call.1} parent=5 // pred_region
        %s173 = ssub.s32 %s18, 1
        // Predicated region
        $region13: #{tpu_custom_call.1} parent=11 // pred_check
          %p174 = pneg %p51
        $region14: #{tpu_custom_call.1} parent=11 // pred_check_branch
          %176 = sbr.rel (%p174) target = $region16
        $region15: #{tpu_custom_call.1} parent=11 // pred_region
          %s178 = ssub.s32 512, 512
          %179 = vsyncadd [#allocation7], %s178
          %s180 = sshll.u32 [#allocation6], 4
          %s181 = int_to_ptr.vmem [resolvable:$true] %s180
          %186 = dma.hbm_to_vmem [thread:$0]  %s0, 512, %s181, [#allocation7], 128, 128, 8
        $region16: #{tpu_custom_call.1} parent=11 // pred_fallthru
          _
      $region12: #{tpu_custom_call.1} parent=5 // pred_fallthru
        _
      %p187 = scmp.lt.s32.totalorder %s18, 4
      // Predicated region
      $region17: #{tpu_custom_call.1} parent=5 // pred_check
        %p188 = pneg %p187
      $region18: #{tpu_custom_call.1} parent=5 // pred_check_branch
        %190 = sbr.rel (%p188) target = $region20
      $region19: #{tpu_custom_call.1} parent=5 // pred_region
        // Predicated region
        $region21: #{tpu_custom_call.1} parent=19 // pred_check
          %p191 = pneg %p73
        $region22: #{tpu_custom_call.1} parent=19 // pred_check_branch
          %193 = sbr.rel (%p191) target = $region24
        $region23: #{tpu_custom_call.1} parent=19 // pred_region
          %s194 = sand.u32 %s18, 1
          %s195 = scalar_lea.sflag [#allocation10], %s194
          %s196 = sand.u32 %s63, 1
          %s197 = smul.addr %s196, 8
          %s198 = scalar_lea.vmem [#allocation9], %s197
          %s200 = ssub.s32 128, 128
          %201 = vsyncadd %s195, %s200
          %s202 = sadd.s32 %s26, %s25
          %s203 = smul.addr %s202, 128
          %s204 = scalar_lea.hbm %s1, %s203
          %s206 = sshll.u32 %s198, 4
          %s207 = int_to_ptr.vmem [resolvable:$true] %s206
          %209 = dma.hbm_to_vmem [thread:$0]  %s204, 128, %s207, %s195
        $region24: #{tpu_custom_call.1} parent=19 // pred_fallthru
          _
        // Predicated region
        $region25: #{tpu_custom_call.1} parent=19 // pred_check
          %p210 = pneg %p101
        $region26: #{tpu_custom_call.1} parent=19 // pred_check_branch
          %212 = sbr.rel (%p210) target = $region28
        $region27: #{tpu_custom_call.1} parent=19 // pred_region
          %s213 = sand.u32 %s18, 1
          %s214 = scalar_lea.sflag [#allocation10], %s213
          %s215 = sand.u32 %s91, 1
          %s216 = smul.addr %s215, 8
          %s217 = scalar_lea.vmem [#allocation11], %s216
          %s219 = ssub.s32 128, 128
          %220 = vsyncadd %s214, %s219
          %s221 = sadd.s32 %s26, %s25
          %s222 = smul.addr %s221, 128
          %s223 = scalar_lea.hbm %s2, %s222
          %s225 = sshll.u32 %s217, 4
          %s226 = int_to_ptr.vmem [resolvable:$true] %s225
          %228 = dma.hbm_to_vmem [thread:$0]  %s223, 128, %s226, %s214
        $region28: #{tpu_custom_call.1} parent=19 // pred_fallthru
          _
      $region20: #{tpu_custom_call.1} parent=5 // pred_fallthru
        _
      %p229 = scmp.le.s32.totalorder 1, %s18
      %p230 = scmp.lt.s32.totalorder %s18, 5
      %p231 = pnand %p229, %p230
      %p232 = pneg %p231
      // Predicated region
      $region29: #{tpu_custom_call.1} parent=5 // pred_check
        _
      $region30: #{tpu_custom_call.1} parent=5 // pred_check_branch
        %234 = sbr.rel (%p231) target = $region32
      $region31: #{tpu_custom_call.1} parent=5 // pred_region
        %s235 = ssub.s32 %s18, 1
        // Predicated region
        $region33: #{tpu_custom_call.1} parent=31 // pred_check
          %p236 = pneg %p51
        $region34: #{tpu_custom_call.1} parent=31 // pred_check_branch
          %238 = sbr.rel (%p236) target = $region36
        $region35: #{tpu_custom_call.1} parent=31 // pred_region
          %239 = dma.done [#allocation7], 512
        $region36: #{tpu_custom_call.1} parent=31 // pred_fallthru
          _
        %s240 = sand.u32 %s23, 1
        %s241 = scalar_lea.sflag [#allocation10], %s240
        %s242 = sand.u32 %s66, 1
        %s243 = smul.addr %s242, 8
        %s244 = scalar_lea.vmem [#allocation9], %s243
        // Predicated region
        $region37: #{tpu_custom_call.1} parent=31 // pred_check
          %p245 = pneg %p79
        $region38: #{tpu_custom_call.1} parent=31 // pred_check_branch
          %247 = sbr.rel (%p245) target = $region40
        $region39: #{tpu_custom_call.1} parent=31 // pred_region
          %248 = dma.done %s241, 128
        $region40: #{tpu_custom_call.1} parent=31 // pred_fallthru
          _
        %s249 = sand.u32 %s23, 1
        %s250 = scalar_lea.sflag [#allocation10], %s249
        %s251 = sand.u32 %s94, 1
        %s252 = smul.addr %s251, 8
        %s253 = scalar_lea.vmem [#allocation11], %s252
        // Predicated region
        $region41: #{tpu_custom_call.1} parent=31 // pred_check
          %p254 = pneg %p107
        $region42: #{tpu_custom_call.1} parent=31 // pred_check_branch
          %256 = sbr.rel (%p254) target = $region44
        $region43: #{tpu_custom_call.1} parent=31 // pred_region
          %257 = dma.done %s250, 128
        $region44: #{tpu_custom_call.1} parent=31 // pred_fallthru
          _
        %p258 = pneg %p51
        %p259 = pneg %p48
        %s260 = sand.u32 %s23, 1
        %s261 = scalar_lea.sflag [#allocation10], %s260
        %s262 = sand.u32 %s66, 1
        %s263 = smul.addr %s262, 8
        %s264 = scalar_lea.vmem [#allocation9], %s263
        %p265 = pneg %p79
        %p266 = pneg %p76
        %s267 = sand.u32 %s23, 1
        %s268 = scalar_lea.sflag [#allocation10], %s267
        %s269 = sand.u32 %s94, 1
        %s270 = smul.addr %s269, 8
        %s271 = scalar_lea.vmem [#allocation11], %s270
        %p272 = pneg %p107
        %p273 = pneg %p104
        %p274 = pneg %p133
        %p275 = pneg %p130
        %p276 = scmp.lt.s32.totalorder %s27, 3
        %s277 = scalar_select %p276, %s27, 3
        %s278 = smul.addr %s277, 16
        %s279 = smul.addr %s278, 8
        %s280 = scalar_lea.vmem %s3, %s279
        %p281 = pneg %p159
        %p282 = pneg %p156
        %s283 = sand.u32 %s146, 1
        %s284 = scalar_lea.sflag [#allocation8], %s283
        %s285 = sand.u32 %s146, 1
        %s286 = scalar_lea.vmem [#allocation12], %s285
        %p287 = scmp.lt.s32.totalorder %s27, 3
        %s288 = scalar_select %p287, %s27, 3
        %s289 = smul.addr %s288, 16
        %s290 = smul.addr %s289, 8
        %s291 = scalar_lea.vmem %s3, %s290
        %p292 = scmp.eq.s32.totalorder %s28, 0
        // Predicated region
        $region45: #{tpu_custom_call.1} parent=31 // pred_check
          %p293 = pneg %p292
        $region46: #{tpu_custom_call.1} parent=31 // pred_check_branch
          %295 = sbr.rel (%p293) target = $region48
        $region47: #{tpu_custom_call.1} parent=31 // pred_region
          %vm296 = vcmask 0
          %297 = vst.msk [vmem:[#allocation2] sm:$0x1] %vm296, -1e+30
          %298 = vst [vmem:[#allocation3] sm:$0x1] 0.0
          %vm299 = vcmask 261120
          %300 = vst.msk [vmem:[#allocation4] sm:$0xff] %vm299, 0.0
          %301 = vst.msk [vmem:[#allocation4 + $0x8] sm:$0xff] %vm299, 0.0
          %302 = vst.msk [vmem:[#allocation4 + $0x10] sm:$0xff] %vm299, 0.0
          %303 = vst.msk [vmem:[#allocation4 + $0x18] sm:$0xff] %vm299, 0.0
          %304 = vst.msk [vmem:[#allocation4 + $0x20] sm:$0xff] %vm299, 0.0
          %305 = vst.msk [vmem:[#allocation4 + $0x28] sm:$0xff] %vm299, 0.0
          %306 = vst.msk [vmem:[#allocation4 + $0x30] sm:$0xff] %vm299, 0.0
          %307 = vst.msk [vmem:[#allocation4 + $0x38] sm:$0xff] %vm299, 0.0
          %308 = vst.msk [vmem:[#allocation4 + $0x40] sm:$0xff] %vm299, 0.0
          %309 = vst.msk [vmem:[#allocation4 + $0x48] sm:$0xff] %vm299, 0.0
          %310 = vst.msk [vmem:[#allocation4 + $0x50] sm:$0xff] %vm299, 0.0
          %311 = vst.msk [vmem:[#allocation4 + $0x58] sm:$0xff] %vm299, 0.0
          %312 = vst.msk [vmem:[#allocation4 + $0x60] sm:$0xff] %vm299, 0.0
          %313 = vst.msk [vmem:[#allocation4 + $0x68] sm:$0xff] %vm299, 0.0
          %314 = vst.msk [vmem:[#allocation4 + $0x70] sm:$0xff] %vm299, 0.0
          %315 = vst.msk [vmem:[#allocation4 + $0x78] sm:$0xff] %vm299, 0.0
          %vm316 = vcmask 253952
          %317 = vst.msk [vmem:[#allocation5] sm:$0x1] %vm316, 0.0
        $region48: #{tpu_custom_call.1} parent=31 // pred_fallthru
          _
        %v318 = vld [vmem:[%s244] sm:$0xff]
        %v319 = vld [vmem:[%s253] sm:$0xff]
        %v320 = vld [vmem:[#allocation6] sm:$0xff]
        %v321 = vld [vmem:[#allocation6 + $0x8] sm:$0xff]
        %v322 = vld [vmem:[#allocation6 + $0x10] sm:$0xff]
        %v323 = vld [vmem:[#allocation6 + $0x18] sm:$0xff]
        %vm324 = vcmask 261120
        %v326 = vsel %vm324, %v318, 0
        %328 = vmatprep.subr.mxu0 0.0
        %329 = vmatpush1.msra.mxu0 %v320
        %330 = vmatprep.subr.mxu0 0.0
        %331 = vmatpush1.msra.mxu0 %v321
        %332 = vmatprep.subr.mxu0 0.0
        %333 = vmatpush1.msra.mxu0 %v322
        %334 = vmatprep.subr.mxu0 0.0
        %335 = vmatpush1.msra.mxu0 %v323
        %336 = vmatprep.subr.mxu0 0.0
        %337 = vmatpush1.msra.mxu0 0.0
        %338 = vmatprep.subr.mxu0 0.0
        %339 = vmatpush1.msra.mxu0 0.0
        %340 = vmatprep.subr.mxu0 0.0
        %341 = vmatpush1.msra.mxu0 0.0
        %342 = vmatprep.subr.mxu0 0.0
        %343 = vmatpush1.msra.mxu0 0.0
        %344 = vmatprep.subr.mxu0 0.0
        %345 = vmatpush1.msra.mxu0 0.0
        %346 = vmatprep.subr.mxu0 0.0
        %347 = vmatpush1.msra.mxu0 0.0
        %348 = vmatprep.subr.mxu0 0.0
        %349 = vmatpush1.msra.mxu0 0.0
        %350 = vmatprep.subr.mxu0 0.0
        %351 = vmatpush1.msra.mxu0 0.0
        %352 = vmatprep.subr.mxu0 0.0
        %353 = vmatpush1.msra.mxu0 0.0
        %354 = vmatprep.subr.mxu0 0.0
        %355 = vmatpush1.msra.mxu0 0.0
        %356 = vmatprep.subr.mxu0 0.0
        %357 = vmatpush1.msra.mxu0 0.0
        %358 = vmatprep.subr.mxu0 0.0
        %359 = vmatpush1.msra.mxu0 0.0
        %360 = vmatprep.subr.mxu0 0.0
        %361 = vmatpush1.msra.mxu0 0.0
        %362 = vmatprep.subr.mxu0 0.0
        %363 = vmatpush1.msra.mxu0 0.0
        %364 = vmatprep.subr.mxu0 0.0
        %365 = vmatpush1.msra.mxu0 0.0
        %366 = vmatprep.subr.mxu0 0.0
        %367 = vmatpush1.msra.mxu0 0.0
        %368 = vmatprep.subr.mxu0 0.0
        %369 = vmatpush1.msra.mxu0 0.0
        %370 = vmatprep.subr.mxu0 0.0
        %371 = vmatpush1.msra.mxu0 0.0
        %372 = vmatprep.subr.mxu0 0.0
        %373 = vmatpush1.msra.mxu0 0.0
        %374 = vmatprep.subr.mxu0 0.0
        %375 = vmatpush1.msra.mxu0 0.0
        %376 = vmatprep.subr.mxu0 0.0
        %377 = vmatpush1.msra.mxu0 0.0
        %378 = vmatprep.subr.mxu0 0.0
        %379 = vmatpush1.msra.mxu0 0.0
        %380 = vmatprep.subr.mxu0 0.0
        %381 = vmatpush1.msra.mxu0 0.0
        %382 = vmatprep.subr.mxu0 0.0
        %383 = vmatpush1.msra.mxu0 0.0
        %384 = vmatprep.subr.mxu0 0.0
        %385 = vmatpush1.msra.mxu0 0.0
        %386 = vmatprep.subr.mxu0 0.0
        %387 = vmatpush1.msra.mxu0 0.0
        %388 = vmatprep.subr.mxu0 0.0
        %389 = vmatpush1.msra.mxu0 0.0
        %390 = vmatprep.subr.mxu0 0.0
        %391 = vmatpush1.msra.mxu0 0.0
        %392 = vmatprep.mubr.f32.mxu0 0.0
        %393 = vmatmul.mubr.f32.gmra.mrb[0].mxu0 %v326
        %v394 = vpop.f32.mrb[0].mxu0
        %v395 = vadd.f32 0.0, %v394
        %v396 = vpop.f32.mrb[0].mxu0
        %397 = vdwg.mxu0
        %v398 = vmul.f32 %v318, %v318
        %v399 = vsel %vm324, %v398, 0.0
        %400 = vadd.xlane.f32.xlu0 %v399
        %v401 = vpop.xlane.xlu0 %400
        %v402 = vmul.f32 %v401, 0.088388346
        %v403 = vlaneseq
        %v404 = vand.u32 %v403, 127
        %vm405 = vcmp.lt.s32.totalorder %v404, 110
        %v406 = vsel %vm405, %v395, -1e+30
        %407 = vmax.xlane.f32.xlu0 %v406
        %v408 = vpop.xlane.xlu0 %407
        %v409 = vrot.slane %v408, 4
        %v410 = vmax.f32 %v408, %v409
        %v411 = vrot.slane %v410, 2
        %v412 = vmax.f32 %v410, %v411
        %v413 = vrot.slane %v412, 1
        %v414 = vmax.f32 %v412, %v413
        %s415 = vtos %v414
        %v416 = vstv %s415
        %v417 = vld [vmem:[#allocation2] sm:$0x1]
        %v418 = vmax.f32 %v417, %v416
        %v419 = vsub.f32 %v417, %v418
        %v420 = vmul.f32 %v419, 1.442695
        %v421 = vpow.pop %v420
        %v422 = vsub.f32 %v406, %v402
        %v424 = vlaneseq
        %v425 = vshrl.u32 %v424, 7
        %v426 = vsub.s32 0, %v425
        %v427 = vrot.slane %v418, %v426
        %428 = vset.pattern.permute.xlu0 0
        %429 = vperm.xlu0 %428, %v427
        %v430 = vpop.permute.xlu0 %429
        %v432 = vsub.f32 %v422, %v430
        %v433 = vmul.f32 %v432, 1.442695
        %v434 = vpow.pop %v433
        %v435 = vld [vmem:[#allocation3] sm:$0x1]
        %437 = vset.pattern.permute.xlu0 0
        %438 = vperm.xlu0 %437, %v421
        %v439 = vpop.permute.xlu0 %438
        %v441 = vlaneseq
        %v442 = vshrl.u32 %v441, 7
        %v443 = vsub.s32 0, %v442
        %v444 = vrot.slane %v439, %v443
        %v445 = vmul.f32 %v444, %v435
        %v446 = vrot.slane %v434, 4
        %v447 = vadd.f32 %v434, %v446
        %v448 = vrot.slane %v447, 2
        %v449 = vadd.f32 %v447, %v448
        %v450 = vrot.slane %v449, 1
        %v451 = vadd.f32 %v449, %v450
        %v452 = vadd.f32 %v445, %v451
        %453 = vst [vmem:[#allocation3] sm:$0x1] %v452
        %454 = vxpose.xlu0.b32.start [1/16] %v434, 128
        %455 = vxpose.xlu0.b32.cont [2/16] 0.0, 128
        %456 = vxpose.xlu0.b32.cont [3/16] 0.0, 128
        %457 = vxpose.xlu0.b32.cont [4/16] 0.0, 128
        %458 = vxpose.xlu0.b32.cont [5/16] 0.0, 128
        %459 = vxpose.xlu0.b32.cont [6/16] 0.0, 128
        %460 = vxpose.xlu0.b32.cont [7/16] 0.0, 128
        %461 = vxpose.xlu0.b32.cont [8/16] 0.0, 128
        %462 = vxpose.xlu0.b32.cont [9/16] 0.0, 128
        %463 = vxpose.xlu0.b32.cont [10/16] 0.0, 128
        %464 = vxpose.xlu0.b32.cont [11/16] 0.0, 128
        %465 = vxpose.xlu0.b32.cont [12/16] 0.0, 128
        %466 = vxpose.xlu0.b32.cont [13/16] 0.0, 128
        %467 = vxpose.xlu0.b32.cont [14/16] 0.0, 128
        %468 = vxpose.xlu0.b32.cont [15/16] 0.0, 128
        %469 = vxpose.xlu0.b32.end [16/16] 0.0, 128
        %v470 = vpop.trf.xlu0
        %v471 = vpop.trf.xlu0
        %v472 = vpop.trf.xlu0
        %v473 = vpop.trf.xlu0
        %v474 = vpop.trf.xlu0
        %v475 = vpop.trf.xlu0
        %v476 = vpop.trf.xlu0
        %v477 = vpop.trf.xlu0
        %v478 = vpop.trf.xlu0
        %v479 = vpop.trf.xlu0
        %v480 = vpop.trf.xlu0
        %v481 = vpop.trf.xlu0
        %v482 = vpop.trf.xlu0
        %v483 = vpop.trf.xlu0
        %v484 = vpop.trf.xlu0
        %v485 = vpop.trf.xlu0
        %vm486 = vcmask 64512
        %v488 = vsel %vm486, %v470, 0
        %v491 = vsel %vm486, %v471, 0
        %v494 = vsel %vm486, %v472, 0
        %v497 = vsel %vm486, %v473, 0
        %v500 = vsel %vm486, %v474, 0
        %v503 = vsel %vm486, %v475, 0
        %v506 = vsel %vm486, %v476, 0
        %v509 = vsel %vm486, %v477, 0
        %v512 = vsel %vm486, %v478, 0
        %v515 = vsel %vm486, %v479, 0
        %v518 = vsel %vm486, %v480, 0
        %v521 = vsel %vm486, %v481, 0
        %v524 = vsel %vm486, %v482, 0
        %v527 = vsel %vm486, %v483, 0
        %v530 = vsel %vm486, %v484, 0
        %v533 = vsel %vm486, %v485, 0
        %535 = vmatprep.subr.mxu0 0.0
        %536 = vmatpush1.msra.mxu0 %v319
        %537 = vmatprep.subr.mxu0 0.0
        %538 = vmatpush1.msra.mxu0 0.0
        %539 = vmatprep.subr.mxu0 0.0
        %540 = vmatpush1.msra.mxu0 0.0
        %541 = vmatprep.subr.mxu0 0.0
        %542 = vmatpush1.msra.mxu0 0.0
        %543 = vmatprep.subr.mxu0 0.0
        %544 = vmatpush1.msra.mxu0 0.0
        %545 = vmatprep.subr.mxu0 0.0
        %546 = vmatpush1.msra.mxu0 0.0
        %547 = vmatprep.subr.mxu0 0.0
        %548 = vmatpush1.msra.mxu0 0.0
        %549 = vmatprep.subr.mxu0 0.0
        %550 = vmatpush1.msra.mxu0 0.0
        %551 = vmatprep.subr.mxu0 0.0
        %552 = vmatpush1.msra.mxu0 0.0
        %553 = vmatprep.subr.mxu0 0.0
        %554 = vmatpush1.msra.mxu0 0.0
        %555 = vmatprep.subr.mxu0 0.0
        %556 = vmatpush1.msra.mxu0 0.0
        %557 = vmatprep.subr.mxu0 0.0
        %558 = vmatpush1.msra.mxu0 0.0
        %559 = vmatprep.subr.mxu0 0.0
        %560 = vmatpush1.msra.mxu0 0.0
        %561 = vmatprep.subr.mxu0 0.0
        %562 = vmatpush1.msra.mxu0 0.0
        %563 = vmatprep.subr.mxu0 0.0
        %564 = vmatpush1.msra.mxu0 0.0
        %565 = vmatprep.subr.mxu0 0.0
        %566 = vmatpush1.msra.mxu0 0.0
        %567 = vmatprep.subr.mxu0 0.0
        %568 = vmatpush1.msra.mxu0 0.0
        %569 = vmatprep.subr.mxu0 0.0
        %570 = vmatpush1.msra.mxu0 0.0
        %571 = vmatprep.subr.mxu0 0.0
        %572 = vmatpush1.msra.mxu0 0.0
        %573 = vmatprep.subr.mxu0 0.0
        %574 = vmatpush1.msra.mxu0 0.0
        %575 = vmatprep.subr.mxu0 0.0
        %576 = vmatpush1.msra.mxu0 0.0
        %577 = vmatprep.subr.mxu0 0.0
        %578 = vmatpush1.msra.mxu0 0.0
        %579 = vmatprep.subr.mxu0 0.0
        %580 = vmatpush1.msra.mxu0 0.0
        %581 = vmatprep.subr.mxu0 0.0
        %582 = vmatpush1.msra.mxu0 0.0
        %583 = vmatprep.subr.mxu0 0.0
        %584 = vmatpush1.msra.mxu0 0.0
        %585 = vmatprep.subr.mxu0 0.0
        %586 = vmatpush1.msra.mxu0 0.0
        %587 = vmatprep.subr.mxu0 0.0
        %588 = vmatpush1.msra.mxu0 0.0
        %589 = vmatprep.subr.mxu0 0.0
        %590 = vmatpush1.msra.mxu0 0.0
        %591 = vmatprep.subr.mxu0 0.0
        %592 = vmatpush1.msra.mxu0 0.0
        %593 = vmatprep.subr.mxu0 0.0
        %594 = vmatpush1.msra.mxu0 0.0
        %595 = vmatprep.subr.mxu0 0.0
        %596 = vmatpush1.msra.mxu0 0.0
        %597 = vmatprep.subr.mxu0 0.0
        %598 = vmatpush1.msra.mxu0 0.0
        %599 = vmatprep.mubr.f32.mxu0 0.0
        %600 = vmatmul.mubr.f32.gmra.mrb[0].mxu0 %v488
        %v601 = vpop.f32.mrb[0].mxu0
        %v602 = vadd.f32 0.0, %v601
        %v603 = vpop.f32.mrb[0].mxu0
        %604 = vmatprep.mubr.f32.mxu0 0.0
        %605 = vmatmul.mubr.f32.gmra.mrb[0].mxu0 %v491
        %v606 = vpop.f32.mrb[0].mxu0
        %v607 = vadd.f32 0.0, %v606
        %v608 = vpop.f32.mrb[0].mxu0
        %609 = vmatprep.mubr.f32.mxu0 0.0
        %610 = vmatmul.mubr.f32.gmra.mrb[0].mxu0 %v494
        %v611 = vpop.f32.mrb[0].mxu0
        %v612 = vadd.f32 0.0, %v611
        %v613 = vpop.f32.mrb[0].mxu0
        %614 = vmatprep.mubr.f32.mxu0 0.0
        %615 = vmatmul.mubr.f32.gmra.mrb[0].mxu0 %v497
        %v616 = vpop.f32.mrb[0].mxu0
        %v617 = vadd.f32 0.0, %v616
        %v618 = vpop.f32.mrb[0].mxu0
        %619 = vmatprep.mubr.f32.mxu0 0.0
        %620 = vmatmul.mubr.f32.gmra.mrb[0].mxu0 %v500
        %v621 = vpop.f32.mrb[0].mxu0
        %v622 = vadd.f32 0.0, %v621
        %v623 = vpop.f32.mrb[0].mxu0
        %624 = vmatprep.mubr.f32.mxu0 0.0
        %625 = vmatmul.mubr.f32.gmra.mrb[0].mxu0 %v503
        %v626 = vpop.f32.mrb[0].mxu0
        %v627 = vadd.f32 0.0, %v626
        %v628 = vpop.f32.mrb[0].mxu0
        %629 = vmatprep.mubr.f32.mxu0 0.0
        %630 = vmatmul.mubr.f32.gmra.mrb[0].mxu0 %v506
        %v631 = vpop.f32.mrb[0].mxu0
        %v632 = vadd.f32 0.0, %v631
        %v633 = vpop.f32.mrb[0].mxu0
        %634 = vmatprep.mubr.f32.mxu0 0.0
        %635 = vmatmul.mubr.f32.gmra.mrb[0].mxu0 %v509
        %v636 = vpop.f32.mrb[0].mxu0
        %v637 = vadd.f32 0.0, %v636
        %v638 = vpop.f32.mrb[0].mxu0
        %639 = vmatprep.mubr.f32.mxu0 0.0
        %640 = vmatmul.mubr.f32.gmra.mrb[0].mxu0 %v512
        %v641 = vpop.f32.mrb[0].mxu0
        %v642 = vadd.f32 0.0, %v641
        %v643 = vpop.f32.mrb[0].mxu0
        %644 = vmatprep.mubr.f32.mxu0 0.0
        %645 = vmatmul.mubr.f32.gmra.mrb[0].mxu0 %v515
        %v646 = vpop.f32.mrb[0].mxu0
        %v647 = vadd.f32 0.0, %v646
        %v648 = vpop.f32.mrb[0].mxu0
        %649 = vmatprep.mubr.f32.mxu0 0.0
        %650 = vmatmul.mubr.f32.gmra.mrb[0].mxu0 %v518
        %v651 = vpop.f32.mrb[0].mxu0
        %v652 = vadd.f32 0.0, %v651
        %v653 = vpop.f32.mrb[0].mxu0
        %654 = vmatprep.mubr.f32.mxu0 0.0
        %655 = vmatmul.mubr.f32.gmra.mrb[0].mxu0 %v521
        %v656 = vpop.f32.mrb[0].mxu0
        %v657 = vadd.f32 0.0, %v656
        %v658 = vpop.f32.mrb[0].mxu0
        %659 = vmatprep.mubr.f32.mxu0 0.0
        %660 = vmatmul.mubr.f32.gmra.mrb[0].mxu0 %v524
        %v661 = vpop.f32.mrb[0].mxu0
        %v662 = vadd.f32 0.0, %v661
        %v663 = vpop.f32.mrb[0].mxu0
        %664 = vmatprep.mubr.f32.mxu0 0.0
        %665 = vmatmul.mubr.f32.gmra.mrb[0].mxu0 %v527
        %v666 = vpop.f32.mrb[0].mxu0
        %v667 = vadd.f32 0.0, %v666
        %v668 = vpop.f32.mrb[0].mxu0
        %669 = vmatprep.mubr.f32.mxu0 0.0
        %670 = vmatmul.mubr.f32.gmra.mrb[0].mxu0 %v530
        %v671 = vpop.f32.mrb[0].mxu0
        %v672 = vadd.f32 0.0, %v671
        %v673 = vpop.f32.mrb[0].mxu0
        %674 = vmatprep.mubr.f32.mxu0 0.0
        %675 = vmatmul.mubr.f32.gmra.mrb[0].mxu0 %v533
        %v676 = vpop.f32.mrb[0].mxu0
        %v677 = vadd.f32 0.0, %v676
        %v678 = vpop.f32.mrb[0].mxu0
        %679 = vdwg.mxu0
        %v680 = vld [vmem:[#allocation4] sm:$0xff]
        %v681 = vld [vmem:[#allocation4 + $0x8] sm:$0xff]
        %v682 = vld [vmem:[#allocation4 + $0x10] sm:$0xff]
        %v683 = vld [vmem:[#allocation4 + $0x18] sm:$0xff]
        %v684 = vld [vmem:[#allocation4 + $0x20] sm:$0xff]
        %v685 = vld [vmem:[#allocation4 + $0x28] sm:$0xff]
        %v686 = vld [vmem:[#allocation4 + $0x30] sm:$0xff]
        %v687 = vld [vmem:[#allocation4 + $0x38] sm:$0xff]
        %v688 = vld [vmem:[#allocation4 + $0x40] sm:$0xff]
        %v689 = vld [vmem:[#allocation4 + $0x48] sm:$0xff]
        %v690 = vld [vmem:[#allocation4 + $0x50] sm:$0xff]
        %v691 = vld [vmem:[#allocation4 + $0x58] sm:$0xff]
        %v692 = vld [vmem:[#allocation4 + $0x60] sm:$0xff]
        %v693 = vld [vmem:[#allocation4 + $0x68] sm:$0xff]
        %v694 = vld [vmem:[#allocation4 + $0x70] sm:$0xff]
        %v695 = vld [vmem:[#allocation4 + $0x78] sm:$0xff]
        %v696 = vlaneseq
        %v697 = vshrl.u32 %v696, 7
        %v698 = vsub.s32 0, %v697
        %v699 = vrot.slane %v421, %v698
        %700 = vset.pattern.permute.xlu0 0
        %701 = vperm.xlu0 %700, %v699
        %v702 = vpop.permute.xlu0 %701
        %v704 = vmul.f32 %v702, %v680
        %v705 = vmul.f32 %v702, %v681
        %v706 = vmul.f32 %v702, %v682
        %v707 = vmul.f32 %v702, %v683
        %v708 = vmul.f32 %v702, %v684
        %v709 = vmul.f32 %v702, %v685
        %v710 = vmul.f32 %v702, %v686
        %v711 = vmul.f32 %v702, %v687
        %v712 = vmul.f32 %v702, %v688
        %v713 = vmul.f32 %v702, %v689
        %v714 = vmul.f32 %v702, %v690
        %v715 = vmul.f32 %v702, %v691
        %v716 = vmul.f32 %v702, %v692
        %v717 = vmul.f32 %v702, %v693
        %v718 = vmul.f32 %v702, %v694
        %v719 = vmul.f32 %v702, %v695
        %v720 = vadd.f32 %v704, %v602
        %v721 = vadd.f32 %v705, %v607
        %v722 = vadd.f32 %v706, %v612
        %v723 = vadd.f32 %v707, %v617
        %v724 = vadd.f32 %v708, %v622
        %v725 = vadd.f32 %v709, %v627
        %v726 = vadd.f32 %v710, %v632
        %v727 = vadd.f32 %v711, %v637
        %v728 = vadd.f32 %v712, %v642
        %v729 = vadd.f32 %v713, %v647
        %v730 = vadd.f32 %v714, %v652
        %v731 = vadd.f32 %v715, %v657
        %v732 = vadd.f32 %v716, %v662
        %v733 = vadd.f32 %v717, %v667
        %v734 = vadd.f32 %v718, %v672
        %v735 = vadd.f32 %v719, %v677
        %736 = vst.msk [vmem:[#allocation4] sm:$0xff] %vm324, %v720
        %737 = vst.msk [vmem:[#allocation4 + $0x8] sm:$0xff] %vm324, %v721
        %738 = vst.msk [vmem:[#allocation4 + $0x10] sm:$0xff] %vm324, %v722
        %739 = vst.msk [vmem:[#allocation4 + $0x18] sm:$0xff] %vm324, %v723
        %740 = vst.msk [vmem:[#allocation4 + $0x20] sm:$0xff] %vm324, %v724
        %741 = vst.msk [vmem:[#allocation4 + $0x28] sm:$0xff] %vm324, %v725
        %742 = vst.msk [vmem:[#allocation4 + $0x30] sm:$0xff] %vm324, %v726
        %743 = vst.msk [vmem:[#allocation4 + $0x38] sm:$0xff] %vm324, %v727
        %744 = vst.msk [vmem:[#allocation4 + $0x40] sm:$0xff] %vm324, %v728
        %745 = vst.msk [vmem:[#allocation4 + $0x48] sm:$0xff] %vm324, %v729
        %746 = vst.msk [vmem:[#allocation4 + $0x50] sm:$0xff] %vm324, %v730
        %747 = vst.msk [vmem:[#allocation4 + $0x58] sm:$0xff] %vm324, %v731
        %748 = vst.msk [vmem:[#allocation4 + $0x60] sm:$0xff] %vm324, %v732
        %749 = vst.msk [vmem:[#allocation4 + $0x68] sm:$0xff] %vm324, %v733
        %750 = vst.msk [vmem:[#allocation4 + $0x70] sm:$0xff] %vm324, %v734
        %751 = vst.msk [vmem:[#allocation4 + $0x78] sm:$0xff] %vm324, %v735
        %v752 = vld [vmem:[#allocation5] sm:$0x1]
        %v753 = vsel %vm324, %v319, 0.0
        %v754 = vrot.slane %v753, 4
        %v755 = vadd.f32 %v753, %v754
        %v756 = vrot.slane %v755, 2
        %v757 = vadd.f32 %v755, %v756
        %v758 = vrot.slane %v757, 1
        %v759 = vadd.f32 %v757, %v758
        %v760 = vadd.f32 %v752, %v759
        %vm761 = vcmask 253952
        %762 = vst.msk [vmem:[#allocation5] sm:$0x1] %vm761, %v760
        %vm763 = vcmask 0
        %764 = vst.msk [vmem:[#allocation2] sm:$0x1] %vm763, %v418
        // Predicated region
        $region49: #{tpu_custom_call.1} parent=31 // pred_check
          %p765 = pneg %p292
        $region50: #{tpu_custom_call.1} parent=31 // pred_check_branch
          %767 = sbr.rel (%p765) target = $region52
        $region51: #{tpu_custom_call.1} parent=31 // pred_region
          %v768 = vld [vmem:[#allocation3] sm:$0x1]
          %v769 = vmul.f32 %v768, 0.09534626
          %v770 = vadd.f32 %v769, 7.627701e-05
          %771 = vst [vmem:[%s286] sm:$0x1] %v770
          %v772 = vld [vmem:[#allocation4] sm:$0xff]
          %v773 = vld [vmem:[#allocation4 + $0x8] sm:$0xff]
          %v774 = vld [vmem:[#allocation4 + $0x10] sm:$0xff]
          %v775 = vld [vmem:[#allocation4 + $0x18] sm:$0xff]
          %v776 = vld [vmem:[#allocation4 + $0x20] sm:$0xff]
          %v777 = vld [vmem:[#allocation4 + $0x28] sm:$0xff]
          %v778 = vld [vmem:[#allocation4 + $0x30] sm:$0xff]
          %v779 = vld [vmem:[#allocation4 + $0x38] sm:$0xff]
          %v780 = vld [vmem:[#allocation4 + $0x40] sm:$0xff]
          %v781 = vld [vmem:[#allocation4 + $0x48] sm:$0xff]
          %v782 = vld [vmem:[#allocation4 + $0x50] sm:$0xff]
          %v783 = vld [vmem:[#allocation4 + $0x58] sm:$0xff]
          %v784 = vld [vmem:[#allocation4 + $0x60] sm:$0xff]
          %v785 = vld [vmem:[#allocation4 + $0x68] sm:$0xff]
          %v786 = vld [vmem:[#allocation4 + $0x70] sm:$0xff]
          %v787 = vld [vmem:[#allocation4 + $0x78] sm:$0xff]
          %v788 = vmul.f32 %v772, 0.09534626
          %v789 = vmul.f32 %v773, 0.09534626
          %v790 = vmul.f32 %v774, 0.09534626
          %v791 = vmul.f32 %v775, 0.09534626
          %v792 = vmul.f32 %v776, 0.09534626
          %v793 = vmul.f32 %v777, 0.09534626
          %v794 = vmul.f32 %v778, 0.09534626
          %v795 = vmul.f32 %v779, 0.09534626
          %v796 = vmul.f32 %v780, 0.09534626
          %v797 = vmul.f32 %v781, 0.09534626
          %v798 = vmul.f32 %v782, 0.09534626
          %v799 = vmul.f32 %v783, 0.09534626
          %v800 = vmul.f32 %v784, 0.09534626
          %v801 = vmul.f32 %v785, 0.09534626
          %v802 = vmul.f32 %v786, 0.09534626
          %v803 = vmul.f32 %v787, 0.09534626
          %v804 = vld [vmem:[#allocation5] sm:$0x1]
          %v805 = vmul.f32 %v804, 9.534626e-06
          %v807 = vlaneseq
          %v808 = vshrl.u32 %v807, 7
          %v809 = vsub.s32 0, %v808
          %v810 = vrot.slane %v805, %v809
          %v812 = vadd.f32 %v788, %v810
          %v813 = vadd.f32 %v789, %v810
          %v814 = vadd.f32 %v790, %v810
          %v815 = vadd.f32 %v791, %v810
          %v816 = vadd.f32 %v792, %v810
          %v817 = vadd.f32 %v793, %v810
          %v818 = vadd.f32 %v794, %v810
          %v819 = vadd.f32 %v795, %v810
          %v820 = vadd.f32 %v796, %v810
          %v821 = vadd.f32 %v797, %v810
          %v822 = vadd.f32 %v798, %v810
          %v823 = vadd.f32 %v799, %v810
          %v824 = vadd.f32 %v800, %v810
          %v825 = vadd.f32 %v801, %v810
          %v826 = vadd.f32 %v802, %v810
          %v827 = vadd.f32 %v803, %v810
          %828 = vst.msk [vmem:[%s291] sm:$0xff] %vm324, %v812
          %829 = vst.msk [vmem:[%s291 + $0x8] sm:$0xff] %vm324, %v813
          %830 = vst.msk [vmem:[%s291 + $0x10] sm:$0xff] %vm324, %v814
          %831 = vst.msk [vmem:[%s291 + $0x18] sm:$0xff] %vm324, %v815
          %832 = vst.msk [vmem:[%s291 + $0x20] sm:$0xff] %vm324, %v816
          %833 = vst.msk [vmem:[%s291 + $0x28] sm:$0xff] %vm324, %v817
          %834 = vst.msk [vmem:[%s291 + $0x30] sm:$0xff] %vm324, %v818
          %835 = vst.msk [vmem:[%s291 + $0x38] sm:$0xff] %vm324, %v819
          %836 = vst.msk [vmem:[%s291 + $0x40] sm:$0xff] %vm324, %v820
          %837 = vst.msk [vmem:[%s291 + $0x48] sm:$0xff] %vm324, %v821
          %838 = vst.msk [vmem:[%s291 + $0x50] sm:$0xff] %vm324, %v822
          %839 = vst.msk [vmem:[%s291 + $0x58] sm:$0xff] %vm324, %v823
          %840 = vst.msk [vmem:[%s291 + $0x60] sm:$0xff] %vm324, %v824
          %841 = vst.msk [vmem:[%s291 + $0x68] sm:$0xff] %vm324, %v825
          %842 = vst.msk [vmem:[%s291 + $0x70] sm:$0xff] %vm324, %v826
          %843 = vst.msk [vmem:[%s291 + $0x78] sm:$0xff] %vm324, %v827
        $region52: #{tpu_custom_call.1} parent=31 // pred_fallthru
          _
        %p844 = scmp.lt.s32.totalorder %s27, 3
        %s845 = scalar_select %p844, %s27, 3
        %s846 = smul.addr %s845, 16
        %s847 = smul.addr %s846, 8
        %s848 = scalar_lea.vmem %s3, %s847
        %s849 = sand.u32 %s146, 1
        %s850 = scalar_lea.sflag [#allocation8], %s849
        %s851 = sand.u32 %s146, 1
        %s852 = scalar_lea.vmem [#allocation12], %s851
        // Predicated region
        $region53: #{tpu_custom_call.1} parent=31 // pred_check
          %p853 = pneg %p130
        $region54: #{tpu_custom_call.1} parent=31 // pred_check_branch
          %855 = sbr.rel (%p853) target = $region56
        $region55: #{tpu_custom_call.1} parent=31 // pred_region
          _
        $region56: #{tpu_custom_call.1} parent=31 // pred_fallthru
          _
        // Predicated region
        $region57: #{tpu_custom_call.1} parent=31 // pred_check
          %p856 = pneg %p156
        $region58: #{tpu_custom_call.1} parent=31 // pred_check_branch
          %858 = sbr.rel (%p856) target = $region60
        $region59: #{tpu_custom_call.1} parent=31 // pred_region
          %s860 = ssub.s32 16, 16
          %861 = vsyncadd %s850, %s860
          %s862 = smul.addr %s27, 16
          %s863 = scalar_lea.hbm %s4, %s862
          %s865 = sshll.u32 %s852, 4
          %s866 = int_to_ptr.vmem [resolvable:$true] %s865
          %868 = dma.vmem_to_hbm [thread:$0]  %s866, 16, %s863, %s850
        $region60: #{tpu_custom_call.1} parent=31 // pred_fallthru
          _
      $region32: #{tpu_custom_call.1} parent=5 // pred_fallthru
        _
      %p869 = scmp.le.s32.totalorder 2, %s18
      // Predicated region
      $region61: #{tpu_custom_call.1} parent=5 // pred_check
        %p870 = pneg %p869
      $region62: #{tpu_custom_call.1} parent=5 // pred_check_branch
        %872 = sbr.rel (%p870) target = $region64
      $region63: #{tpu_custom_call.1} parent=5 // pred_region
        %s873 = ssub.s32 %s18, 2
        // Predicated region
        $region65: #{tpu_custom_call.1} parent=63 // pred_check
          %p874 = pneg %p136
        $region66: #{tpu_custom_call.1} parent=63 // pred_check_branch
          %876 = sbr.rel (%p874) target = $region68
        $region67: #{tpu_custom_call.1} parent=63 // pred_region
          %p877 = scmp.lt.s32.totalorder %s29, 3
          %s878 = scalar_select %p877, %s29, 3
          %s879 = smul.addr %s878, 16
          %s880 = smul.addr %s879, 8
          %s881 = scalar_lea.vmem %s3, %s880
        $region68: #{tpu_custom_call.1} parent=63 // pred_fallthru
          _
        // Predicated region
        $region69: #{tpu_custom_call.1} parent=63 // pred_check
          %p882 = pneg %p162
        $region70: #{tpu_custom_call.1} parent=63 // pred_check_branch
          %884 = sbr.rel (%p882) target = $region72
        $region71: #{tpu_custom_call.1} parent=63 // pred_region
          %s885 = sand.u32 %s147, 1
          %s886 = scalar_lea.sflag [#allocation8], %s885
          %s887 = sand.u32 %s147, 1
          %s888 = scalar_lea.vmem [#allocation12], %s887
          %889 = dma.done %s886, 16
        $region72: #{tpu_custom_call.1} parent=63 // pred_fallthru
          _
      $region64: #{tpu_custom_call.1} parent=5 // pred_fallthru
        _
    $region6: #{tpu_custom_call.1} parent=1 // loop_footer
      %s22 = sadd.s32 1, %s18
    $region7: #{tpu_custom_call.1} parent=1 // loop_footer_branch
      %17 = sbr.rel target = $region3
    $region8: #{tpu_custom_call.1} parent=1 // loop_exit
      _
    %890 = vsyncpa [#allocation7], 1
    %s891 = scalar_lea.sflag [#allocation7], 1
    %892 = vsyncpa %s891, 1
    %893 = vsyncpa [#allocation10], 1
    %s894 = scalar_lea.sflag [#allocation10], 1
    %895 = vsyncpa %s894, 1
    %896 = vsyncpa [#allocation8], 1
    %s897 = scalar_lea.sflag [#allocation8], 1
    %898 = vsyncpa %s897, 1

</llo_original>
